<compile_context>
chip_gen: v5e
topology: v5e:2x2
jax: 0.10.0
libtpu: 0.0.40
codegen_flags: <defaults>
</compile_context>

<pallas_src>
import jax
import jax.numpy as jnp
import numpy as np
from jax import lax
from jax.experimental import pallas as pl
from jax.experimental.pallas import tpu as pltpu


def _round_up(v, m):
    return (v + m - 1) // m * m


def _length_regulator_kernel(kb_ref, ce_ref, ci_ref, x_ref, o_ref):
    """One (output-tile, k-substep) grid point.

    Builds the (tq, tk) 0/1 repeat matrix R for this window of source rows and
    accumulates R @ x[b] into the resident (B, tq, D) output block.  The k-substeps
    touch disjoint source rows, so each output frame receives exactly one nonzero
    contribution and the accumulation is exact in the output dtype.
    """
    del kb_ref                                  # consumed by the index_maps only
    nb, tq, _ = o_ref.shape
    tk = ce_ref.shape[-1]
    k = pl.program_id(1)

    @pl.when(k == 0)
    def _init():
        o_ref[...] = jnp.zeros_like(o_ref)

    # Global output-frame index of every row of this tile (int32 compares).
    t0 = pl.program_id(0) * tq
    t_idx = lax.broadcasted_iota(jnp.int32, (tq, tk), 0) + t0

    # R[t, i] = 1  iff  csum_excl[i] <= t < csum_incl[i]; exactly 0/1, so building it
    # directly in x.dtype (e.g. bf16) is lossless.
    r = jnp.logical_and(t_idx >= ce_ref[...], t_idx < ci_ref[...]).astype(x_ref.dtype)

    for bi in range(nb):                        # B is tiny for TTS inference (1-2)
        o_ref[bi] += jnp.dot(r, x_ref[bi], preferred_element_type=o_ref.dtype)


def onnx_length_regulator(x, dur, *, alpha=1.0, max_out_len=64, tq=None):
    """Pallas equivalent of OnnxLengthRegurator.forward.

    x:   (B, T_in, D) float (f32 or bf16)
    dur: (B, T_in) int   (only dur[0] is used, matching the PyTorch code)
    Returns (B, max_out_len, D); frames beyond sum(dur) are zero-padded.
    """
    b, t_in, d = x.shape
    itemsize = jnp.dtype(x.dtype).itemsize

    # --- wrapper-side prep: O(T_in) scalars + one O(B*T_in*D) gather (<< output size) ---
    dur0 = dur[0]
    if alpha != 1.0:
        dur0 = jnp.round(dur0.astype(jnp.float32) * alpha)    # torch.round (half-to-even)
    dur0 = jnp.maximum(dur0, 0).astype(jnp.int32)

    # Stable-compact zero-duration rows to the end: they never contribute output frames
    # and the cumsum of the remaining rows is unchanged, but compaction guarantees that
    # the rows feeding any window of tq output frames occupy <= tq consecutive indices,
    # which makes the 2-block K window safe.
    order = jnp.argsort((dur0 == 0).astype(jnp.int32), stable=True)
    dur_c = jnp.take(dur0, order)
    x_c = jnp.take(x, order, axis=1)

    csum_incl = jnp.cumsum(dur_c, dtype=jnp.int32)            # (T_in,) inclusive
    csum_excl = csum_incl - dur_c                             # (T_in,) exclusive

    # --- output-time tile: >= 4 grid steps (pipelining + megacore) within a ~24 MiB budget ---
    if tq is None:
        tq = max(8, min(512, _round_up(pl.cdiv(max_out_len, 4), 8)))
        per_row = 4 * b * d * itemsize                        # out + x blocks, double-buffered
        tq = min(tq, max(8, (24 * 1024 * 1024 // per_row) // 8 * 8))
    tq = max(8, _round_up(min(tq, _round_up(max_out_len, 8)), 8))
    nq = pl.cdiv(max_out_len, tq)                             # partial last tile is fine

    # --- K window: 2 consecutive tk-blocks around each tile's first source row, unless the
    # whole (padded) K axis is already at least as small (then a single full-K substep). ---
    tk_win = max(128, _round_up(tq, 128))                     # csum rows are lane-major -> 128-mult
    dense_k = _round_up(t_in, 8)
    if 2 * tk_win < dense_k:
        n_sub, tk = 2, tk_win
        t_in_pad = max(_round_up(t_in + tq, tk), n_sub * tk)
    else:
        n_sub, tk = 1, dense_k
        t_in_pad = dense_k
    nkb = t_in_pad // tk

    # Pad K: padded rows get csum_excl == csum_incl == BIG -> all-zero R columns.
    big = jnp.full((t_in_pad - t_in,), 2 ** 30, jnp.int32)
    ce = jnp.concatenate([csum_excl, big]).reshape(1, t_in_pad)
    ci = jnp.concatenate([csum_incl, big]).reshape(1, t_in_pad)
    x_pad = jnp.pad(x_c, ((0, 0), (0, t_in_pad - t_in), (0, 0)))

    # Scalar prefetch: first source block needed by each output tile.
    t0s = jnp.arange(nq, dtype=jnp.int32) * tq
    i_start = jnp.searchsorted(csum_incl, t0s, side="right")  # first row with csum_incl > t0
    kb_start = jnp.minimum(i_start // tk, nkb - n_sub).astype(jnp.int32)

    # Explicit VMEM sizing (fits v5e 16 MiB default; well under v6e/v7x scoped limits).
    est = (2 * b * tq * d * itemsize                          # out block, double-buffered
           + 2 * b * tk * d * itemsize                        # x block, double-buffered
           + 2 * 2 * 8 * tk * 4)                              # csum rows (sublane-padded), x2 buffers
    vmem_limit = int(min(max(4 * est, 16 << 20), 40 << 20))

    return pl.pallas_call(
        _length_regulator_kernel,
        out_shape=jax.ShapeDtypeStruct((b, max_out_len, d), x.dtype),
        grid_spec=pltpu.PrefetchScalarGridSpec(
            num_scalar_prefetch=1,
            grid=(nq, n_sub),
            in_specs=[
                pl.BlockSpec((1, tk), lambda ti, k, kb: (0, kb[ti] + k)),        # csum_excl window
                pl.BlockSpec((1, tk), lambda ti, k, kb: (0, kb[ti] + k)),        # csum_incl window
                pl.BlockSpec((b, tk, d), lambda ti, k, kb: (0, kb[ti] + k, 0)),  # x source window
            ],
            out_specs=pl.BlockSpec((b, tq, d), lambda ti, k, kb: (0, ti, 0)),
        ),
        compiler_params=pltpu.CompilerParams(
            dimension_semantics=("parallel", "arbitrary"),    # T_out tiles shard across TCs
            vmem_limit_bytes=vmem_limit,
        ),
    )(kb_start, ce, ci, x_pad)


def _numpy_reference(x, dur0, max_out_len):
    x_np = np.asarray(x)
    d_np = np.asarray(dur0)
    nz = np.repeat(np.arange(x_np.shape[1]), d_np)
    ref = x_np[:, nz]                                          # (B, sum(dur), D)
    out = np.zeros((x_np.shape[0], max_out_len, x_np.shape[2]), x_np.dtype)
    n = min(ref.shape[1], max_out_len)
    out[:, :n] = ref[:, :n]
    return out


if __name__ == "__main__":
    key = jax.random.PRNGKey(0)
    k1, k2, k3, k4 = jax.random.split(key, 4)

    # --- test 1: small shapes, dense (full-K) path, includes zero durations ---
    B, T_IN, D = 2, 8, 32
    MAX_OUT = 64
    x = jax.random.normal(k1, (B, T_IN, D), dtype=jnp.float32)
    dur = jax.random.randint(k2, (B, T_IN), 0, 6, dtype=jnp.int32)

    out = jax.block_until_ready(onnx_length_regulator(x, dur, alpha=1.0, max_out_len=MAX_OUT))
    ref = _numpy_reference(x, dur[0], MAX_OUT)
    np.testing.assert_allclose(np.asarray(out), ref, rtol=1e-5, atol=1e-5)

    # --- test 2: longer input, exercises the scalar-prefetch K-window path (+ truncation) ---
    B2, T_IN2, D2 = 1, 400, 32
    MAX_OUT2 = 256
    x2 = jax.random.normal(k3, (B2, T_IN2, D2), dtype=jnp.float32)
    dur2 = jax.random.randint(k4, (B2, T_IN2), 0, 4, dtype=jnp.int32)

    out2 = jax.block_until_ready(onnx_length_regulator(x2, dur2, alpha=1.0, max_out_len=MAX_OUT2))
    ref2 = _numpy_reference(x2, dur2[0], MAX_OUT2)
    np.testing.assert_allclose(np.asarray(out2), ref2, rtol=1e-5, atol=1e-5)

    print("KERNEL_OK")
</pallas_src>

<mosaic_0001>
module attributes {stable_mosaic.version = 11 : i64} {
  func.func @_length_regulator_kernel(%arg0: i32, %arg1: i32, %arg2: memref<4xi32, #tpu.memory_space<smem>>, %arg3: memref<1x8xi32, #tpu.memory_space<vmem>>, %arg4: memref<1x8xi32, #tpu.memory_space<vmem>>, %arg5: memref<2x8x32xf32, #tpu.memory_space<vmem>>, %arg6: memref<2x16x32xf32, #tpu.memory_space<vmem>>) attributes {dimension_semantics = [#tpu.dimension_semantics<parallel>, #tpu.dimension_semantics<arbitrary>], iteration_bounds = array<i64: 4, 1>, scalar_prefetch = 1 : i64, scratch_operands = 0 : i64, tpu.core_type = #tpu.core_type<tc>, window_params = [{transform_indices = @transform_0, window_bounds = array<i64: 1, 8>}, {transform_indices = @transform_1, window_bounds = array<i64: 1, 8>}, {transform_indices = @transform_2, window_bounds = array<i64: 2, 8, 32>}, {transform_indices = @transform_3, window_bounds = array<i64: 2, 16, 32>}]} {
    %c0_i32 = arith.constant 0 : i32
    %0 = arith.cmpi eq, %arg1, %c0_i32 : i32
    %1 = arith.extui %0 : i1 to i32
    %c0_i32_0 = arith.constant 0 : i32
    %2 = arith.cmpi ne, %1, %c0_i32_0 : i32
    scf.if %2 {
      %cst_22 = arith.constant 0.000000e+00 : f32
      %34 = vector.broadcast %cst_22 : f32 to vector<2x16x32xf32>
      %c0_23 = arith.constant 0 : index
      %c0_24 = arith.constant 0 : index
      %c0_25 = arith.constant 0 : index
      %35 = vector.load %arg6[%c0_23, %c0_24, %c0_25] : memref<2x16x32xf32, #tpu.memory_space<vmem>>, vector<2x16x32xf32>
      tpu.vector_store %arg6[%c0_23, %c0_24, %c0_25], %34 {strides = array<i32>} : memref<2x16x32xf32, #tpu.memory_space<vmem>>, vector<2x16x32xf32>,
    } else {
    }
    %c16_i32 = arith.constant 16 : i32
    %3 = arith.muli %arg0, %c16_i32 : i32
    %4 = tpu.iota {dimensions = array<i32: 0>} : vector<16x8xi32>
    %5 = vector.broadcast %3 : i32 to vector<16x8xi32>
    %6 = arith.addi %4, %5 : vector<16x8xi32>
    %c0 = arith.constant 0 : index
    %c0_1 = arith.constant 0 : index
    %7 = vector.load %arg3[%c0, %c0_1] : memref<1x8xi32, #tpu.memory_space<vmem>>, vector<1x8xi32>
    %8 = vector.broadcast %7 : vector<1x8xi32> to vector<16x8xi32>
    %9 = arith.cmpi sge, %6, %8 : vector<16x8xi32>
    %c0_2 = arith.constant 0 : index
    %c0_3 = arith.constant 0 : index
    %10 = vector.load %arg4[%c0_2, %c0_3] : memref<1x8xi32, #tpu.memory_space<vmem>>, vector<1x8xi32>
    %11 = vector.broadcast %10 : vector<1x8xi32> to vector<16x8xi32>
    %12 = arith.cmpi slt, %6, %11 : vector<16x8xi32>
    %13 = arith.andi %9, %12 : vector<16x8xi1>
    %14 = arith.extui %13 : vector<16x8xi1> to vector<16x8xi32>
    %15 = arith.sitofp %14 : vector<16x8xi32> to vector<16x8xf32>
    %c0_4 = arith.constant 0 : index
    %c0_5 = arith.constant 0 : index
    %c0_6 = arith.constant 0 : index
    %16 = vector.load %arg6[%c0_4, %c0_5, %c0_6] : memref<2x16x32xf32, #tpu.memory_space<vmem>>, vector<1x16x32xf32>
    %17 = vector.shape_cast %16 : vector<1x16x32xf32> to vector<16x32xf32>
    %c0_7 = arith.constant 0 : index
    %c0_8 = arith.constant 0 : index
    %c0_9 = arith.constant 0 : index
    %18 = vector.load %arg5[%c0_7, %c0_8, %c0_9] : memref<2x8x32xf32, #tpu.memory_space<vmem>>, vector<1x8x32xf32>
    %19 = vector.shape_cast %18 : vector<1x8x32xf32> to vector<8x32xf32>
    %cst = arith.constant dense<0.000000e+00> : vector<16x32xf32>
    %20 = tpu.matmul %15, %19, %cst {dimension_numbers = #tpu.dot_dimension_numbers<[1], [0], [0], [1], [0, 0, 1, 1], [], []>} : vector<16x8xf32>, vector<8x32xf32>, vector<16x32xf32> -> vector<16x32xf32>
    %21 = arith.addf %17, %20 : vector<16x32xf32>
    %c0_10 = arith.constant 0 : index
    %c0_11 = arith.constant 0 : index
    %c0_12 = arith.constant 0 : index
    %22 = vector.load %arg6[%c0_10, %c0_11, %c0_12] : memref<2x16x32xf32, #tpu.memory_space<vmem>>, vector<1x16x32xf32>
    %23 = vector.shape_cast %22 : vector<1x16x32xf32> to vector<16x32xf32>
    %24 = vector.shape_cast %21 : vector<16x32xf32> to vector<1x16x32xf32>
    tpu.vector_store %arg6[%c0_10, %c0_11, %c0_12], %24 {strides = array<i32>} : memref<2x16x32xf32, #tpu.memory_space<vmem>>, vector<1x16x32xf32>,
    %c1 = arith.constant 1 : index
    %c0_13 = arith.constant 0 : index
    %c0_14 = arith.constant 0 : index
    %25 = vector.load %arg6[%c1, %c0_13, %c0_14] : memref<2x16x32xf32, #tpu.memory_space<vmem>>, vector<1x16x32xf32>
    %26 = vector.shape_cast %25 : vector<1x16x32xf32> to vector<16x32xf32>
    %c1_15 = arith.constant 1 : index
    %c0_16 = arith.constant 0 : index
    %c0_17 = arith.constant 0 : index
    %27 = vector.load %arg5[%c1_15, %c0_16, %c0_17] : memref<2x8x32xf32, #tpu.memory_space<vmem>>, vector<1x8x32xf32>
    %28 = vector.shape_cast %27 : vector<1x8x32xf32> to vector<8x32xf32>
    %cst_18 = arith.constant dense<0.000000e+00> : vector<16x32xf32>
    %29 = tpu.matmul %15, %28, %cst_18 {dimension_numbers = #tpu.dot_dimension_numbers<[1], [0], [0], [1], [0, 0, 1, 1], [], []>} : vector<16x8xf32>, vector<8x32xf32>, vector<16x32xf32> -> vector<16x32xf32>
    %30 = arith.addf %26, %29 : vector<16x32xf32>
    %c1_19 = arith.constant 1 : index
    %c0_20 = arith.constant 0 : index
    %c0_21 = arith.constant 0 : index
    %31 = vector.load %arg6[%c1_19, %c0_20, %c0_21] : memref<2x16x32xf32, #tpu.memory_space<vmem>>, vector<1x16x32xf32>
    %32 = vector.shape_cast %31 : vector<1x16x32xf32> to vector<16x32xf32>
    %33 = vector.shape_cast %30 : vector<16x32xf32> to vector<1x16x32xf32>
    tpu.vector_store %arg6[%c1_19, %c0_20, %c0_21], %33 {strides = array<i32>} : memref<2x16x32xf32, #tpu.memory_space<vmem>>, vector<1x16x32xf32>,
    return
  }
  func.func @transform_0(%arg0: i32, %arg1: i32, %arg2: memref<4xi32, #tpu.memory_space<smem>>) -> (i32, i32) {
    %0 = arith.index_cast %arg0 : i32 to index
    %1 = memref.load %arg2[%0] : memref<4xi32, #tpu.memory_space<smem>>
    %2 = arith.addi %1, %arg1 : i32
    %c0_i32 = arith.constant 0 : i32
    %c0_i32_0 = arith.constant 0 : i32
    return %c0_i32, %2 : i32, i32
  }
  func.func @transform_1(%arg0: i32, %arg1: i32, %arg2: memref<4xi32, #tpu.memory_space<smem>>) -> (i32, i32) {
    %0 = arith.index_cast %arg0 : i32 to index
    %1 = memref.load %arg2[%0] : memref<4xi32, #tpu.memory_space<smem>>
    %2 = arith.addi %1, %arg1 : i32
    %c0_i32 = arith.constant 0 : i32
    %c0_i32_0 = arith.constant 0 : i32
    return %c0_i32, %2 : i32, i32
  }
  func.func @transform_2(%arg0: i32, %arg1: i32, %arg2: memref<4xi32, #tpu.memory_space<smem>>) -> (i32, i32, i32) {
    %0 = arith.index_cast %arg0 : i32 to index
    %1 = memref.load %arg2[%0] : memref<4xi32, #tpu.memory_space<smem>>
    %2 = arith.addi %1, %arg1 : i32
    %c0_i32 = arith.constant 0 : i32
    %c0_i32_0 = arith.constant 0 : i32
    %c0_i32_1 = arith.constant 0 : i32
    return %c0_i32, %2, %c0_i32_0 : i32, i32, i32
  }
  func.func @transform_3(%arg0: i32, %arg1: i32, %arg2: memref<4xi32, #tpu.memory_space<smem>>) -> (i32, i32, i32) {
    %c0_i32 = arith.constant 0 : i32
    %c0_i32_0 = arith.constant 0 : i32
    %c0_i32_1 = arith.constant 0 : i32
    return %c0_i32, %arg0, %c0_i32_0 : i32, i32, i32
  }
}

</mosaic_0001>

<llo_original>
// kernel: tpu_custom_call.1
$region0: #{tpu_custom_call.1}
  #allocation0 [shape = 'u32[]', space=smem, size = 0x4, offset = 0x4, fixed_abs, tag = 'smem constant byte address 0x4 - core index']
  #allocation1 [shape = 'u32[72,128]{1,0:T(1,128)}', space=vmem, size = 0x9000, scoped, tag = 'internal scratch']
  #allocation2 [shape = 's32[1]{0}', space=sflag, size = 0x4, scoped, tag = 'scoped memory for tpu_custom_call.1']
  #allocation3 [shape = 'u8[512]{0}', space=smem, size = 0x200, scoped, tag = 'prefetched SMEM operand 0']
  %s0 = inlined_call_operand.hbm [shape: s32[4], index: 0, kind: input, shape index: {}]
  %s1 = inlined_call_operand.hbm [shape: s32[1,8], index: 1, kind: input, shape index: {}]
  %s2 = inlined_call_operand.vmem [shape: s32[1,8], index: 2, kind: input, shape index: {}]
  %s3 = inlined_call_operand.hbm [shape: f32[2,8,32], index: 3, kind: input, shape index: {}]
  %s4 = inlined_call_operand.vmem [shape: f32[2,64,32], index: 4, kind: output, shape index: {}]
  %s5 = sld [smem:[#allocation0]]
  $region91: #{tpu_custom_call.1} parent=0
    _
  %s7 = ssub.s32 1, %s5
  %s8 = scalar_select 0, %s7, %s5
  %s10 = sshll.u32 %s0, 4
  %s11 = int_to_ptr.hbm [resolvable:$true] %s10
  %13 = dma.hbm_to_smem %s11, 16, [#allocation3], [#allocation2]
  %15 = dma.done [#allocation2], 16
  %16 = sfence
  $region1: #{tpu_custom_call.1} parent=0
    #allocation4 [shape = 'u8[1024]{0}', space=vmem, size = 0x400, scoped, tag = 'input window, operand 1']
    #allocation5 [shape = 's32[2]{0}', space=sflag, size = 0x8, scoped, tag = 'scoped memory for tpu_custom_call.1']
    #allocation6 [shape = 'u8[16384]{0}', space=vmem, size = 0x4000, scoped, tag = 'input window, operand 3']
    #allocation7 [shape = 's32[2]{0}', space=sflag, size = 0x8, scoped, tag = 'scoped memory for tpu_custom_call.1']
    #allocation8 [shape = 'u8[32768]{0}', space=vmem, size = 0x8000, scoped, tag = 'output window, operand 0']
    %17 = vsyncpa [#allocation5], 0
    %s18 = scalar_lea.sflag [#allocation5], 1
    %19 = vsyncpa %s18, 0
    %20 = vsyncpa [#allocation7], 0
    %s21 = scalar_lea.sflag [#allocation7], 1
    %22 = vsyncpa %s21, 0
    loop: start=0, step=1, limit=6
    $region2: #{tpu_custom_call.1} parent=1 // loop_pre_header
      _
    $region3: #{tpu_custom_call.1} parent=1 // loop_header
      %s24 = sphi 0, %s28
      %p25 = scmp.ge.s32.totalorder %s24, 6
      %s31 = sphi 0, %s43
      %s32 = sphi 0, %s39
      %s33 = sphi 0, %s31
      %s34 = sphi 0, %s32
      %s35 = sphi 0, %s33
      %s36 = sphi 0, %s34
      %s50 = sphi 0, %s52
      %s53 = sphi 0, %s50
      %s54 = sphi 0, %s53
      %s70 = sphi 0, %s54
      %s80 = sphi 0, %s82
      %s83 = sphi 0, %s80
      %s84 = sphi 0, %s83
      %s100 = sphi 0, %s84
      %s110 = sphi 0, %s112
      %s113 = sphi 0, %s110
      %s114 = sphi 0, %s113
      %s130 = sphi 0, %s114
      %s136 = sphi 0, %s138
      %s139 = sphi 0, %s136
      %s140 = sphi 0, %s139
      %s156 = sphi 0, %s140
    $region4: #{tpu_custom_call.1} parent=1 // loop_header_branch
      %27 = sbr.rel (%p25) target = $region8
    $region5: #{tpu_custom_call.1} parent=1 // loop_body
      %s29 = ssub.s32 %s24, 1
      %s30 = ssub.s32 %s24, 2
      %s37 = sadd.s32 1, %s32
      %p38 = scmp.ge.s32.totalorder %s37, 1
      %s39 = scalar_select %p38, 0, %s37
      %s40 = sadd.s32 1, %s31
      %s41 = scalar_select %p38, %s40, %s31
      %p42 = scmp.ge.s32.totalorder %s41, 4
      %s43 = scalar_select %p42, 0, %s41
      %s44 = sld [smem:[#allocation3 + %s31]]
      %s45 = sadd.s32 %s44, %s32
      %s46 = sld [smem:[#allocation3 + %s43]]
      %s47 = sadd.s32 %s46, %s39
      %s48 = ssub.s32 %s45, %s47
      %p49 = scmp.eq.s32.totalorder %s48, 0
      %s51 = sadd.s32 %s50, 1
      %s52 = scalar_select %p49, %s50, %s51
      %p55 = pneg %p49
      %p56 = scmp.eq.s32.totalorder %s24, 3
      %p57 = por %p55, %p56
      %p58 = scmp.ne.s32.totalorder %s50, %s53
      %p59 = scmp.eq.s32.totalorder %s24, 0
      %p60 = por %p58, %p59
      %p61 = scmp.ne.s32.totalorder %s50, %s53
      %p62 = scmp.eq.s32.totalorder %s29, 3
      %p63 = por %p61, %p62
      %p64 = scmp.ne.s32.totalorder %s53, %s54
      %p65 = scmp.eq.s32.totalorder %s29, 0
      %p66 = por %p64, %p65
      %p67 = scmp.ne.s32.totalorder %s53, %s54
      %p68 = scmp.eq.s32.totalorder %s30, 3
      %p69 = por %p67, %p68
      %p71 = scmp.ne.s32.totalorder %s54, %s70
      %p72 = scmp.eq.s32.totalorder %s30, 0
      %p73 = por %p71, %p72
      %s74 = sld [smem:[#allocation3 + %s31]]
      %s75 = sadd.s32 %s74, %s32
      %s76 = sld [smem:[#allocation3 + %s43]]
      %s77 = sadd.s32 %s76, %s39
      %s78 = ssub.s32 %s75, %s77
      %p79 = scmp.eq.s32.totalorder %s78, 0
      %s81 = sadd.s32 %s80, 1
      %s82 = scalar_select %p79, %s80, %s81
      %p85 = pneg %p79
      %p86 = scmp.eq.s32.totalorder %s24, 3
      %p87 = por %p85, %p86
      %p88 = scmp.ne.s32.totalorder %s80, %s83
      %p89 = scmp.eq.s32.totalorder %s24, 0
      %p90 = por %p88, %p89
      %p91 = scmp.ne.s32.totalorder %s80, %s83
      %p92 = scmp.eq.s32.totalorder %s29, 3
      %p93 = por %p91, %p92
      %p94 = scmp.ne.s32.totalorder %s83, %s84
      %p95 = scmp.eq.s32.totalorder %s29, 0
      %p96 = por %p94, %p95
      %p97 = scmp.ne.s32.totalorder %s83, %s84
      %p98 = scmp.eq.s32.totalorder %s30, 3
      %p99 = por %p97, %p98
      %p101 = scmp.ne.s32.totalorder %s84, %s100
      %p102 = scmp.eq.s32.totalorder %s30, 0
      %p103 = por %p101, %p102
      %s104 = sld [smem:[#allocation3 + %s31]]
      %s105 = sadd.s32 %s104, %s32
      %s106 = sld [smem:[#allocation3 + %s43]]
      %s107 = sadd.s32 %s106, %s39
      %s108 = ssub.s32 %s105, %s107
      %p109 = scmp.eq.s32.totalorder %s108, 0
      %s111 = sadd.s32 %s110, 1
      %s112 = scalar_select %p109, %s110, %s111
      %p115 = pneg %p109
      %p116 = scmp.eq.s32.totalorder %s24, 3
      %p117 = por %p115, %p116
      %p118 = scmp.ne.s32.totalorder %s110, %s113
      %p119 = scmp.eq.s32.totalorder %s24, 0
      %p120 = por %p118, %p119
      %p121 = scmp.ne.s32.totalorder %s110, %s113
      %p122 = scmp.eq.s32.totalorder %s29, 3
      %p123 = por %p121, %p122
      %p124 = scmp.ne.s32.totalorder %s113, %s114
      %p125 = scmp.eq.s32.totalorder %s29, 0
      %p126 = por %p124, %p125
      %p127 = scmp.ne.s32.totalorder %s113, %s114
      %p128 = scmp.eq.s32.totalorder %s30, 3
      %p129 = por %p127, %p128
      %p131 = scmp.ne.s32.totalorder %s114, %s130
      %p132 = scmp.eq.s32.totalorder %s30, 0
      %p133 = por %p131, %p132
      %s134 = ssub.s32 %s31, %s43
      %p135 = scmp.eq.s32.totalorder %s134, 0
      %s137 = sadd.s32 %s136, 1
      %s138 = scalar_select %p135, %s136, %s137
      %p141 = pneg %p135
      %p142 = scmp.eq.s32.totalorder %s24, 3
      %p143 = por %p141, %p142
      %p144 = scmp.ne.s32.totalorder %s136, %s139
      %p145 = scmp.eq.s32.totalorder %s24, 0
      %p146 = por %p144, %p145
      %p147 = scmp.ne.s32.totalorder %s136, %s139
      %p148 = scmp.eq.s32.totalorder %s29, 3
      %p149 = por %p147, %p148
      %p150 = scmp.ne.s32.totalorder %s139, %s140
      %p151 = scmp.eq.s32.totalorder %s29, 0
      %p152 = por %p150, %p151
      %p153 = scmp.ne.s32.totalorder %s139, %s140
      %p154 = scmp.eq.s32.totalorder %s30, 3
      %p155 = por %p153, %p154
      %p157 = scmp.ne.s32.totalorder %s140, %s156
      %p158 = scmp.eq.s32.totalorder %s30, 0
      %p159 = por %p157, %p158
      %p160 = scmp.le.s32.totalorder 1, %s24
      %p161 = scmp.lt.s32.totalorder %s24, 5
      %p162 = pnand %p160, %p161
      %p163 = pneg %p162
      // Predicated region
      $region9: #{tpu_custom_call.1} parent=5 // pred_check
        _
      $region10: #{tpu_custom_call.1} parent=5 // pred_check_branch
        %165 = sbr.rel (%p162) target = $region12
      $region11: #{tpu_custom_call.1} parent=5 // pred_region
        %s166 = ssub.s32 %s24, 1
      $region12: #{tpu_custom_call.1} parent=5 // pred_fallthru
        _
      %p167 = scmp.lt.s32.totalorder %s24, 4
      // Predicated region
      $region13: #{tpu_custom_call.1} parent=5 // pred_check
        %p168 = pneg %p167
      $region14: #{tpu_custom_call.1} parent=5 // pred_check_branch
        %170 = sbr.rel (%p168) target = $region16
      $region15: #{tpu_custom_call.1} parent=5 // pred_region
        // Predicated region
        $region17: #{tpu_custom_call.1} parent=15 // pred_check
          %p171 = pneg %p60
        $region18: #{tpu_custom_call.1} parent=15 // pred_check_branch
          %173 = sbr.rel (%p171) target = $region20
        $region19: #{tpu_custom_call.1} parent=15 // pred_region
          %s174 = sand.u32 %s50, 1
          %s175 = scalar_lea.sflag [#allocation5], %s174
          %s176 = sand.u32 %s50, 1
          %s177 = scalar_lea.vmem [#allocation4], %s176
          %s178 = sld [smem:[#allocation3 + %s31]]
          %s179 = sadd.s32 %s178, %s32
          %181 = vsyncadd %s175, 0
          %s182 = scalar_lea.hbm %s1, %s179
          %s184 = sshll.u32 %s182, 4
          %s185 = int_to_ptr.hbm [resolvable:$true] %s184
          %s186 = sshll.u32 %s177, 4
          %s187 = int_to_ptr.vmem [resolvable:$true] %s186
          %189 = dma.hbm_to_vmem [thread:$0]  %s185, 16, %s187, %s175
        $region20: #{tpu_custom_call.1} parent=15 // pred_fallthru
          _
        // Predicated region
        $region21: #{tpu_custom_call.1} parent=15 // pred_check
          %p190 = pneg %p90
        $region22: #{tpu_custom_call.1} parent=15 // pred_check_branch
          %192 = sbr.rel (%p190) target = $region24
        $region23: #{tpu_custom_call.1} parent=15 // pred_region
          %s193 = sld [smem:[#allocation3 + %s31]]
          %s194 = sadd.s32 %s193, %s32
          %p195 = scmp.lt.s32.totalorder %s194, 0
          %s196 = scalar_select %p195, %s194, 0
          %s197 = scalar_lea.vmem %s2, %s196
          %s198 = sld [smem:[#allocation3 + %s31]]
          %s199 = sadd.s32 %s198, %s32
        $region24: #{tpu_custom_call.1} parent=15 // pred_fallthru
          _
        // Predicated region
        $region25: #{tpu_custom_call.1} parent=15 // pred_check
          %p200 = pneg %p120
        $region26: #{tpu_custom_call.1} parent=15 // pred_check_branch
          %202 = sbr.rel (%p200) target = $region28
        $region27: #{tpu_custom_call.1} parent=15 // pred_region
          %s203 = sand.u32 %s110, 1
          %s204 = scalar_lea.sflag [#allocation7], %s203
          %s205 = sand.u32 %s110, 1
          %s206 = smul.addr %s205, 16
          %s207 = scalar_lea.vmem [#allocation6], %s206
          %s208 = sld [smem:[#allocation3 + %s31]]
          %s209 = sadd.s32 %s208, %s32
          %211 = vsyncadd %s204, 0
          %s212 = smul.addr %s209, 8
          %s213 = scalar_lea.hbm %s3, %s212
          %s214 = sshll.u32 %s213, 4
          %s215 = int_to_ptr.hbm [resolvable:$true] %s214
          %s216 = sshll.u32 %s207, 4
          %s217 = int_to_ptr.vmem [resolvable:$true] %s216
          %222 = dma.hbm_to_vmem [thread:$0]  %s215, 256, %s217, %s204, 128, 128, 8
        $region28: #{tpu_custom_call.1} parent=15 // pred_fallthru
          _
      $region16: #{tpu_custom_call.1} parent=5 // pred_fallthru
        _
      %p223 = scmp.le.s32.totalorder 1, %s24
      %p224 = scmp.lt.s32.totalorder %s24, 5
      %p225 = pnand %p223, %p224
      %p226 = pneg %p225
      // Predicated region
      $region29: #{tpu_custom_call.1} parent=5 // pred_check
        _
      $region30: #{tpu_custom_call.1} parent=5 // pred_check_branch
        %228 = sbr.rel (%p225) target = $region32
      $region31: #{tpu_custom_call.1} parent=5 // pred_region
        %s229 = ssub.s32 %s24, 1
        %s230 = sand.u32 %s53, 1
        %s231 = scalar_lea.sflag [#allocation5], %s230
        %s232 = sand.u32 %s53, 1
        %s233 = scalar_lea.vmem [#allocation4], %s232
        // Predicated region
        $region33: #{tpu_custom_call.1} parent=31 // pred_check
          %p234 = pneg %p66
        $region34: #{tpu_custom_call.1} parent=31 // pred_check_branch
          %236 = sbr.rel (%p234) target = $region36
        $region35: #{tpu_custom_call.1} parent=31 // pred_region
          %238 = dma.done %s231, 16
        $region36: #{tpu_custom_call.1} parent=31 // pred_fallthru
          _
        %s239 = sand.u32 %s113, 1
        %s240 = scalar_lea.sflag [#allocation7], %s239
        %s241 = sand.u32 %s113, 1
        %s242 = smul.addr %s241, 16
        %s243 = scalar_lea.vmem [#allocation6], %s242
        // Predicated region
        $region37: #{tpu_custom_call.1} parent=31 // pred_check
          %p244 = pneg %p126
        $region38: #{tpu_custom_call.1} parent=31 // pred_check_branch
          %246 = sbr.rel (%p244) target = $region40
        $region39: #{tpu_custom_call.1} parent=31 // pred_region
          %248 = dma.done %s240, 256
        $region40: #{tpu_custom_call.1} parent=31 // pred_fallthru
          _
        %s249 = sand.u32 %s53, 1
        %s250 = scalar_lea.sflag [#allocation5], %s249
        %s251 = sand.u32 %s53, 1
        %s252 = scalar_lea.vmem [#allocation4], %s251
        %p253 = pneg %p66
        %p254 = pneg %p63
        %s255 = sld [smem:[#allocation3 + %s33]]
        %s256 = sadd.s32 %s255, %s34
        %p257 = scmp.lt.s32.totalorder %s256, 0
        %s258 = scalar_select %p257, %s256, 0
        %s259 = scalar_lea.vmem %s2, %s258
        %p260 = pneg %p96
        %p261 = pneg %p93
        %s262 = sand.u32 %s113, 1
        %s263 = scalar_lea.sflag [#allocation7], %s262
        %s264 = sand.u32 %s113, 1
        %s265 = smul.addr %s264, 16
        %s266 = scalar_lea.vmem [#allocation6], %s265
        %p267 = pneg %p126
        %p268 = pneg %p123
        %p269 = pneg %p152
        %p270 = pneg %p149
        %s271 = sand.u32 %s139, 1
        %s272 = sand.u32 %s139, 1
        %s273 = smul.addr %s272, 32
        %s274 = scalar_lea.vmem [#allocation8], %s273
        %s275 = sld [smem:[#allocation3 + %s33]]
        %s276 = sadd.s32 %s275, %s34
        %s277 = sld [smem:[#allocation3 + %s33]]
        %s278 = sadd.s32 %s277, %s34
        %p279 = scmp.lt.s32.totalorder %s278, 0
        %s280 = scalar_select %p279, %s278, 0
        %s281 = scalar_lea.vmem %s2, %s280
        %s282 = sld [smem:[#allocation3 + %s33]]
        %s283 = sadd.s32 %s282, %s34
        %s284 = sld [smem:[#allocation3 + %s33]]
        %s285 = sadd.s32 %s284, %s34
        %s286 = smul.u32 2, %s33
        %p287 = scmp.eq.s32.totalorder %s34, 0
        // Predicated region
        $region41: #{tpu_custom_call.1} parent=31 // pred_check
          %p288 = pneg %p287
        $region42: #{tpu_custom_call.1} parent=31 // pred_check_branch
          %290 = sbr.rel (%p288) target = $region44
        $region43: #{tpu_custom_call.1} parent=31 // pred_region
          %vm291 = vcmask 261120
          %292 = vst.msk [vmem:[%s274] sm:$0xff] %vm291, 0.0
          %293 = vst.msk [vmem:[%s274 + $0x8] sm:$0xff] %vm291, 0.0
          %294 = vst.msk [vmem:[%s274 + $0x10] sm:$0xff] %vm291, 0.0
          %295 = vst.msk [vmem:[%s274 + $0x18] sm:$0xff] %vm291, 0.0
        $region44: #{tpu_custom_call.1} parent=31 // pred_fallthru
          _
        %s296 = smul.u32 %s33, 16
        %v297 = vlaneseq
        %v298 = vshrl.u32 %v297, 7
        %v299 = vadd.s32 %v298, 8
        %v300 = vstv %s296
        %v301 = vadd.s32 %v298, %v300
        %v302 = vadd.s32 %v299, %v300
        %v303 = vld [vmem:[%s233] sm:$0x1]
        %v304 = vperm.slane %v303, 0
        %vm305 = vcmp.ge.s32.totalorder %v301, %v304
        %vm306 = vcmp.ge.s32.totalorder %v302, %v304
        %v307 = vld [vmem:[%s281] sm:$0x1]
        %v308 = vperm.slane %v307, 0
        %vm309 = vcmp.lt.s32.totalorder %v301, %v308
        %vm310 = vcmp.lt.s32.totalorder %v302, %v308
        %vm311 = vmand %vm305, %vm309
        %vm312 = vmand %vm306, %vm310
        %v313 = vsel %vm311, 1, 0
        %v314 = vsel %vm312, 1, 0
        %v315 = vcvt.s32.f32 %v313
        %v316 = vcvt.s32.f32 %v314
        %v317 = vld [vmem:[%s274] sm:$0xff]
        %v318 = vld [vmem:[%s274 + $0x8] sm:$0xff]
        %v319 = vld [vmem:[%s243] sm:$0xff]
        %vm320 = vcmask 64512
        %v322 = vsel %vm320, %v315, 0
        %v325 = vsel %vm320, %v316, 0
        %327 = vmatpush.msra.mxu0 0.0
        %328 = vmatpush.msra.mxu0 0.0
        %329 = vmatpush.msra.mxu0 0.0
        %330 = vmatpush.msra.mxu0 0.0
        %331 = vmatpush.msra.mxu0 0.0
        %332 = vmatpush.msra.mxu0 0.0
        %333 = vmatpush.msra.mxu0 0.0
        %334 = vmatpush.msra.mxu0 0.0
        %335 = vmatpush.msra.mxu0 0.0
        %336 = vmatpush.msra.mxu0 0.0
        %337 = vmatpush.msra.mxu0 0.0
        %338 = vmatpush.msra.mxu0 0.0
        %339 = vmatpush.msra.mxu0 0.0
        %340 = vmatpush.msra.mxu0 0.0
        %341 = vmatpush.msra.mxu0 0.0
        %342 = vmatpush.msra.mxu0 %v319
        %343 = vmatmul.f32.gmra.mxu0 %v322
        %v344 = vpop.f32.mrf.mxu0
        %v345 = vadd.f32 0.0, %v344
        %346 = vmatmul.f32.gmra.mxu0 %v325
        %v347 = vpop.f32.mrf.mxu0
        %v348 = vadd.f32 0.0, %v347
        %349 = vdwg.mxu0
        %v350 = vadd.f32 %v317, %v345
        %v351 = vadd.f32 %v318, %v348
        %vm352 = vcmask 261120
        %353 = vst.msk [vmem:[%s274] sm:$0xff] %vm352, %v350
        %354 = vst.msk [vmem:[%s274 + $0x8] sm:$0xff] %vm352, %v351
        %s355 = scalar_lea.vmem %s274, 16 [#allocation8]
        %v356 = vld [vmem:[%s355] sm:$0xff]
        %v357 = vld [vmem:[%s355 + $0x8] sm:$0xff]
        %s358 = scalar_lea.vmem %s243, 8 [#allocation6]
        %v359 = vld [vmem:[%s358] sm:$0xff]
        %360 = vmatpush.msra.mxu0 0.0
        %361 = vmatpush.msra.mxu0 0.0
        %362 = vmatpush.msra.mxu0 0.0
        %363 = vmatpush.msra.mxu0 0.0
        %364 = vmatpush.msra.mxu0 0.0
        %365 = vmatpush.msra.mxu0 0.0
        %366 = vmatpush.msra.mxu0 0.0
        %367 = vmatpush.msra.mxu0 0.0
        %368 = vmatpush.msra.mxu0 0.0
        %369 = vmatpush.msra.mxu0 0.0
        %370 = vmatpush.msra.mxu0 0.0
        %371 = vmatpush.msra.mxu0 0.0
        %372 = vmatpush.msra.mxu0 0.0
        %373 = vmatpush.msra.mxu0 0.0
        %374 = vmatpush.msra.mxu0 0.0
        %375 = vmatpush.msra.mxu0 %v359
        %376 = vmatmul.f32.gmra.mxu0 %v322
        %v377 = vpop.f32.mrf.mxu0
        %v378 = vadd.f32 0.0, %v377
        %379 = vmatmul.f32.gmra.mxu0 %v325
        %v380 = vpop.f32.mrf.mxu0
        %v381 = vadd.f32 0.0, %v380
        %382 = vdwg.mxu0
        %v383 = vadd.f32 %v356, %v378
        %v384 = vadd.f32 %v357, %v381
        %385 = vst.msk [vmem:[%s355] sm:$0xff] %vm352, %v383
        %386 = vst.msk [vmem:[%s355 + $0x8] sm:$0xff] %vm352, %v384
        %s387 = sand.u32 %s139, 1
        %s388 = sand.u32 %s139, 1
        %s389 = smul.addr %s388, 32
        %s390 = scalar_lea.vmem [#allocation8], %s389
        // Predicated region
        $region45: #{tpu_custom_call.1} parent=31 // pred_check
          %p391 = pneg %p149
        $region46: #{tpu_custom_call.1} parent=31 // pred_check_branch
          %393 = sbr.rel (%p391) target = $region48
        $region47: #{tpu_custom_call.1} parent=31 // pred_region
          %s394 = smul.u32 2, %s33
          %s395 = smul.addr %s394, 8
          %s396 = scalar_lea.vmem %s4, %s395
          // Predicated region
          $region49: #{tpu_custom_call.1} parent=47 // pred_check
            _
          $region50: #{tpu_custom_call.1} parent=47 // pred_check_branch
            %398 = sbr.rel (0) target = $region52
          $region51: #{tpu_custom_call.1} parent=47 // pred_region
            // Predicated region
            $region53: #{tpu_custom_call.1} parent=51 // pred_check
              _
            $region54: #{tpu_custom_call.1} parent=51 // pred_check_branch
              %400 = sbr.rel (0) target = $region56
            $region55: #{tpu_custom_call.1} parent=51 // pred_region
              // Predicated region
              $region68: #{tpu_custom_call.1} parent=55 // pred_check
                _
              $region69: #{tpu_custom_call.1} parent=55 // pred_check_branch
                %422 = sbr.rel (0) target = $region71
              $region70: #{tpu_custom_call.1} parent=55 // pred_region
                loop: start=0, step=1, limit=1
                $region72: #{tpu_custom_call.1} parent=70 // loop_pre_header
                  _
                $region73: #{tpu_custom_call.1} parent=70 // loop_header
                  %s424 = sphi 0, %s428
                  %p425 = scmp.ge.s32.totalorder %s424, 1
                  %s429 = sphi %s390, %s390
                  %s430 = sphi %s396, %s396
                $region74: #{tpu_custom_call.1} parent=70 // loop_header_branch
                  %427 = sbr.rel (%p425) target = $region78
                $region75: #{tpu_custom_call.1} parent=70 // loop_body
                  %v431 = vld [vmem:[%s429] sm:$0xff]
                  %432 = vst [vmem:[%s430] sm:$0xff] %v431
                  %v433 = vld [vmem:[%s429 + $0x8] sm:$0xff]
                  %434 = vst [vmem:[%s430 + $0x8] sm:$0xff] %v433
                  %v435 = vld [vmem:[%s429 + $0x10] sm:$0xff]
                  %436 = vst [vmem:[%s430 + $0x40] sm:$0xff] %v435
                  %v437 = vld [vmem:[%s429 + $0x18] sm:$0xff]
                  %438 = vst [vmem:[%s430 + $0x48] sm:$0xff] %v437
                $region76: #{tpu_custom_call.1} parent=70 // loop_footer
                  %s428 = sadd.s32 1, %s424
                $region77: #{tpu_custom_call.1} parent=70 // loop_footer_branch
                  %423 = sbr.rel target = $region73
                $region78: #{tpu_custom_call.1} parent=70 // loop_exit
                  _
              $region71: #{tpu_custom_call.1} parent=55 // pred_fallthru
                _
              // Predicated region
              $region79: #{tpu_custom_call.1} parent=55 // pred_check
                _
              $region80: #{tpu_custom_call.1} parent=55 // pred_check_branch
                %440 = sbr.rel target = $region82
              $region81: #{tpu_custom_call.1} parent=55 // pred_region
                _
              $region82: #{tpu_custom_call.1} parent=55 // pred_fallthru
                _
            $region56: #{tpu_custom_call.1} parent=51 // pred_fallthru
              _
            // Predicated region
            $region57: #{tpu_custom_call.1} parent=51 // pred_check
              _
            $region58: #{tpu_custom_call.1} parent=51 // pred_check_branch
              %402 = sbr.rel target = $region60
            $region59: #{tpu_custom_call.1} parent=51 // pred_region
              %s404 = ssub.s32 256, 1
              loop: start=0, step=1, limit=1
              $region61: #{tpu_custom_call.1} parent=59 // loop_pre_header
                _
              $region62: #{tpu_custom_call.1} parent=59 // loop_header
                %s406 = sphi 0, %s410
                %p407 = scmp.ge.s32.totalorder %s406, 1
                %s411 = sphi %s390, %s390
                %s412 = sphi %s396, %s396
              $region63: #{tpu_custom_call.1} parent=59 // loop_header_branch
                %409 = sbr.rel (%p407) target = $region67
              $region64: #{tpu_custom_call.1} parent=59 // loop_body
                %v413 = vld [vmem:[%s411] sm:%s404]
                %414 = vst [vmem:[%s412] sm:%s404] %v413
                %v415 = vld [vmem:[%s411 + $0x8] sm:%s404]
                %416 = vst [vmem:[%s412 + $0x8] sm:%s404] %v415
                %v417 = vld [vmem:[%s411 + $0x10] sm:%s404]
                %418 = vst [vmem:[%s412 + $0x40] sm:%s404] %v417
                %v419 = vld [vmem:[%s411 + $0x18] sm:%s404]
                %420 = vst [vmem:[%s412 + $0x48] sm:%s404] %v419
              $region65: #{tpu_custom_call.1} parent=59 // loop_footer
                %s410 = sadd.s32 1, %s406
              $region66: #{tpu_custom_call.1} parent=59 // loop_footer_branch
                %405 = sbr.rel target = $region62
              $region67: #{tpu_custom_call.1} parent=59 // loop_exit
                _
            $region60: #{tpu_custom_call.1} parent=51 // pred_fallthru
              _
          $region52: #{tpu_custom_call.1} parent=47 // pred_fallthru
            _
          %441 = vnop
        $region48: #{tpu_custom_call.1} parent=31 // pred_fallthru
          _
      $region32: #{tpu_custom_call.1} parent=5 // pred_fallthru
        _
      %p442 = scmp.le.s32.totalorder 2, %s24
      // Predicated region
      $region83: #{tpu_custom_call.1} parent=5 // pred_check
        %p443 = pneg %p442
      $region84: #{tpu_custom_call.1} parent=5 // pred_check_branch
        %445 = sbr.rel (%p443) target = $region86
      $region85: #{tpu_custom_call.1} parent=5 // pred_region
        %s446 = ssub.s32 %s24, 2
        // Predicated region
        $region87: #{tpu_custom_call.1} parent=85 // pred_check
          %p447 = pneg %p155
        $region88: #{tpu_custom_call.1} parent=85 // pred_check_branch
          %449 = sbr.rel (%p447) target = $region90
        $region89: #{tpu_custom_call.1} parent=85 // pred_region
          %s450 = sand.u32 %s140, 1
          %s451 = sand.u32 %s140, 1
          %s452 = smul.addr %s451, 32
          %s453 = scalar_lea.vmem [#allocation8], %s452
        $region90: #{tpu_custom_call.1} parent=85 // pred_fallthru
          _
      $region86: #{tpu_custom_call.1} parent=5 // pred_fallthru
        _
    $region6: #{tpu_custom_call.1} parent=1 // loop_footer
      %s28 = sadd.s32 1, %s24
    $region7: #{tpu_custom_call.1} parent=1 // loop_footer_branch
      %23 = sbr.rel target = $region3
    $region8: #{tpu_custom_call.1} parent=1 // loop_exit
      _
    %454 = vsyncpa [#allocation5], 1
    %s455 = scalar_lea.sflag [#allocation5], 1
    %456 = vsyncpa %s455, 1
    %457 = vsyncpa [#allocation7], 1
    %s458 = scalar_lea.sflag [#allocation7], 1
    %459 = vsyncpa %s458, 1

</llo_original>
